<compile_context>
chip_gen: v5e
topology: v5e:2x2
jax: 0.10.0
libtpu: 0.0.40
codegen_flags: <defaults>
</compile_context>

<pallas_src>
import jax
import jax.numpy as jnp
from jax.experimental import pallas as pl
from jax.experimental.pallas import tpu as pltpu


def _conv1x1_kernel(w_ref, x_ref, o_ref):
    # w_ref: SMEM (C_out, C_in) f32 scalars
    # x_ref: VMEM (nb, C_in, S, 128)  -- dense (sublane=S, lane=128) tiles
    # o_ref: VMEM (nb, C_out, S, 128) -- dense output, one full unmasked store
    c_out, c_in = w_ref.shape
    # f32 accumulation (v5e has no bf16 VPU ALUs; no-op for f32 inputs).
    x = x_ref[...].astype(jnp.float32)
    outs = []
    for o in range(c_out):                 # tiny static loops -> pure VPU FMAs
        acc = w_ref[o, 0] * x[:, 0]
        for c in range(1, c_in):
            acc = acc + w_ref[o, c] * x[:, c]
        outs.append(acc)
    o_ref[...] = jnp.stack(outs, axis=1).astype(o_ref.dtype)


def _choose_tiles(n, c_in, r_rows, itemsize):
    """Pick (batch-block nb, row-block s_rows).

    Targets ~4 MiB of input per grid step (double-buffered in+out blocks stay
    well under the 32 MiB scoped-VMEM default on every generation, incl. v7x's
    64 MiB physical), while keeping >= 2 grid steps whenever possible so both
    v7x TensorCores get work.
    """
    target_bytes = 4 * 1024 * 1024
    rows_target = max(8, (target_bytes // (c_in * 128 * itemsize)) // 8 * 8)
    if r_rows <= rows_target:
        s_rows = r_rows                    # full extent of row axis (always legal)
    else:
        s_rows = rows_target               # multiple of 8
    row_tiles = pl.cdiv(r_rows, s_rows)

    nb = 1
    # Small feature maps: fold batch elements into one block, but only while
    # the batch axis divides evenly, the grid keeps >= 2 steps, and the
    # per-step footprint stays at/under the target.
    if row_tiles == 1:
        while (n % (nb * 2) == 0
               and (n // (nb * 2)) * row_tiles >= 2
               and nb * 2 * s_rows <= rows_target):
            nb *= 2
    return nb, s_rows


def net_lin_layer_forward(x_nchw, weight_oihw):
    """Forward pass of NetLinLayer (1x1 conv, bias=False, dropout disabled).

    x_nchw:      (N, C_in, H, W)
    weight_oihw: (C_out, C_in, 1, 1)  -- PyTorch Conv2d weight layout
    returns:     (N, C_out, H, W)
    """
    n, c_in, h, w = x_nchw.shape
    c_out = weight_oihw.shape[0]
    hw = h * w

    # Pad the spatial axis to a multiple of 128 lanes -> every store is a
    # full, unmasked vst; padded lanes are sliced off afterwards.
    hw_pad = ((hw + 127) // 128) * 128
    r_rows = hw_pad // 128

    x3 = x_nchw.reshape(n, c_in, hw)
    if hw_pad != hw:
        x3 = jnp.pad(x3, ((0, 0), (0, 0), (0, hw_pad - hw)))
    x4 = x3.reshape(n, c_in, r_rows, 128)          # native NCHW, no transposes
    w2 = weight_oihw.reshape(c_out, c_in).astype(jnp.float32)

    itemsize = jnp.dtype(x_nchw.dtype).itemsize
    nb, s_rows = _choose_tiles(n, c_in, r_rows, itemsize)
    grid = (pl.cdiv(n, nb), pl.cdiv(r_rows, s_rows))

    cost = pl.CostEstimate(
        flops=int(2 * n * hw_pad * c_in * c_out),
        transcendentals=0,
        bytes_accessed=int(n * hw_pad * (c_in + c_out) * itemsize + c_out * c_in * 4),
    )

    out4 = pl.pallas_call(
        _conv1x1_kernel,
        out_shape=jax.ShapeDtypeStruct((n, c_out, r_rows, 128), x_nchw.dtype),
        grid_spec=pltpu.PrefetchScalarGridSpec(
            num_scalar_prefetch=0,
            grid=grid,
            in_specs=[
                # Whole weight array as SMEM scalars (no padded VMEM tile).
                pl.BlockSpec(memory_space=pltpu.MemorySpace.SMEM),
                # Dense (nb, C_in, S, 128) input block.
                pl.BlockSpec((nb, c_in, s_rows, 128), lambda b, j: (b, 0, j, 0)),
            ],
            out_specs=pl.BlockSpec((nb, c_out, s_rows, 128), lambda b, j: (b, 0, j, 0)),
        ),
        compiler_params=pltpu.CompilerParams(
            dimension_semantics=("parallel", "parallel"),
            # Per-step blocks were sized to stay well under this on all
            # generations (incl. v7x's 64 MiB physical VMEM).
            vmem_limit_bytes=32 * 1024 * 1024,
        ),
        cost_estimate=cost,
    )(w2, x4)

    out = out4.reshape(n, c_out, hw_pad)[:, :, :hw]
    return out.reshape(n, c_out, h, w)


if __name__ == "__main__":
    # Module config: chn_in=4, chn_out=1, use_dropout=False (inference).
    N, C_IN, C_OUT, H, W = 2, 4, 1, 16, 16

    key = jax.random.PRNGKey(0)
    kx, kw = jax.random.split(key)
    x = jax.random.normal(kx, (N, C_IN, H, W), dtype=jnp.float32)
    # Deterministic synthetic weights (Conv2d weight shape: [C_out, C_in, 1, 1]).
    weight = jax.random.normal(kw, (C_OUT, C_IN, 1, 1), dtype=jnp.float32) * 0.1

    y = net_lin_layer_forward(x, weight)
    y = jax.block_until_ready(y)

    # Reference: plain-JAX 1x1 conv (einsum over channel axis).
    y_ref = jnp.einsum("nchw,oc->nohw", x, weight.reshape(C_OUT, C_IN))
    assert y.shape == (N, C_OUT, H, W), y.shape
    assert jnp.allclose(y, y_ref, atol=1e-5, rtol=1e-5)

    print("KERNEL_OK")
</pallas_src>

<mosaic_0001>
module attributes {stable_mosaic.version = 11 : i64} {
  func.func @_conv1x1_kernel(%arg0: i32, %arg1: i32, %arg2: memref<1x4xf32, #tpu.memory_space<smem>>, %arg3: memref<1x4x2x128xf32, #tpu.memory_space<vmem>>, %arg4: memref<1x1x2x128xf32, #tpu.memory_space<vmem>>) attributes {dimension_semantics = [#tpu.dimension_semantics<parallel>, #tpu.dimension_semantics<parallel>], iteration_bounds = array<i64: 2, 1>, scalar_prefetch = 0 : i64, scratch_operands = 0 : i64, tpu.core_type = #tpu.core_type<tc>, window_params = [{transform_indices = @transform_0, window_bounds = array<i64: 1, 4>}, {transform_indices = @transform_1, window_bounds = array<i64: 1, 4, 2, 128>}, {transform_indices = @transform_2, window_bounds = array<i64: 1, 1, 2, 128>}]} {
    %c0 = arith.constant 0 : index
    %c0_0 = arith.constant 0 : index
    %c0_1 = arith.constant 0 : index
    %c0_2 = arith.constant 0 : index
    %0 = vector.load %arg3[%c0, %c0_0, %c0_1, %c0_2] : memref<1x4x2x128xf32, #tpu.memory_space<vmem>>, vector<1x4x2x128xf32>
    %c0_3 = arith.constant 0 : index
    %c0_4 = arith.constant 0 : index
    %1 = memref.load %arg2[%c0_3, %c0_4] : memref<1x4xf32, #tpu.memory_space<smem>>
    %2 = vector.extract_strided_slice %0 {offsets = [0, 0, 0, 0], sizes = [1, 1, 2, 128], strides = [1, 1, 1, 1]} : vector<1x4x2x128xf32> to vector<1x1x2x128xf32>
    %3 = vector.shape_cast %2 : vector<1x1x2x128xf32> to vector<1x2x128xf32>
    %4 = vector.broadcast %1 : f32 to vector<1x2x128xf32>
    %5 = arith.mulf %4, %3 : vector<1x2x128xf32>
    %c0_5 = arith.constant 0 : index
    %c1 = arith.constant 1 : index
    %6 = memref.load %arg2[%c0_5, %c1] : memref<1x4xf32, #tpu.memory_space<smem>>
    %7 = vector.extract_strided_slice %0 {offsets = [0, 1, 0, 0], sizes = [1, 1, 2, 128], strides = [1, 1, 1, 1]} : vector<1x4x2x128xf32> to vector<1x1x2x128xf32>
    %8 = vector.shape_cast %7 : vector<1x1x2x128xf32> to vector<1x2x128xf32>
    %9 = vector.broadcast %6 : f32 to vector<1x2x128xf32>
    %10 = arith.mulf %9, %8 : vector<1x2x128xf32>
    %11 = arith.addf %5, %10 : vector<1x2x128xf32>
    %c0_6 = arith.constant 0 : index
    %c2 = arith.constant 2 : index
    %12 = memref.load %arg2[%c0_6, %c2] : memref<1x4xf32, #tpu.memory_space<smem>>
    %13 = vector.extract_strided_slice %0 {offsets = [0, 2, 0, 0], sizes = [1, 1, 2, 128], strides = [1, 1, 1, 1]} : vector<1x4x2x128xf32> to vector<1x1x2x128xf32>
    %14 = vector.shape_cast %13 : vector<1x1x2x128xf32> to vector<1x2x128xf32>
    %15 = vector.broadcast %12 : f32 to vector<1x2x128xf32>
    %16 = arith.mulf %15, %14 : vector<1x2x128xf32>
    %17 = arith.addf %11, %16 : vector<1x2x128xf32>
    %c0_7 = arith.constant 0 : index
    %c3 = arith.constant 3 : index
    %18 = memref.load %arg2[%c0_7, %c3] : memref<1x4xf32, #tpu.memory_space<smem>>
    %19 = vector.extract_strided_slice %0 {offsets = [0, 3, 0, 0], sizes = [1, 1, 2, 128], strides = [1, 1, 1, 1]} : vector<1x4x2x128xf32> to vector<1x1x2x128xf32>
    %20 = vector.shape_cast %19 : vector<1x1x2x128xf32> to vector<1x2x128xf32>
    %21 = vector.broadcast %18 : f32 to vector<1x2x128xf32>
    %22 = arith.mulf %21, %20 : vector<1x2x128xf32>
    %23 = arith.addf %17, %22 : vector<1x2x128xf32>
    %24 = vector.shape_cast %23 : vector<1x2x128xf32> to vector<1x1x2x128xf32>
    %c0_8 = arith.constant 0 : index
    %c0_9 = arith.constant 0 : index
    %c0_10 = arith.constant 0 : index
    %c0_11 = arith.constant 0 : index
    %25 = vector.load %arg4[%c0_8, %c0_9, %c0_10, %c0_11] : memref<1x1x2x128xf32, #tpu.memory_space<vmem>>, vector<1x1x2x128xf32>
    tpu.vector_store %arg4[%c0_8, %c0_9, %c0_10, %c0_11], %24 {strides = array<i32>} : memref<1x1x2x128xf32, #tpu.memory_space<vmem>>, vector<1x1x2x128xf32>,
    return
  }
  func.func @transform_0(%arg0: i32, %arg1: i32) -> (i32, i32) {
    %c0_i32 = arith.constant 0 : i32
    %c0_i32_0 = arith.constant 0 : i32
    %c0_i32_1 = arith.constant 0 : i32
    return %c0_i32, %c0_i32_0 : i32, i32
  }
  func.func @transform_1(%arg0: i32, %arg1: i32) -> (i32, i32, i32, i32) {
    %c0_i32 = arith.constant 0 : i32
    %c0_i32_0 = arith.constant 0 : i32
    %c0_i32_1 = arith.constant 0 : i32
    return %arg0, %c0_i32, %arg1, %c0_i32_0 : i32, i32, i32, i32
  }
  func.func @transform_2(%arg0: i32, %arg1: i32) -> (i32, i32, i32, i32) {
    %c0_i32 = arith.constant 0 : i32
    %c0_i32_0 = arith.constant 0 : i32
    %c0_i32_1 = arith.constant 0 : i32
    return %arg0, %c0_i32, %arg1, %c0_i32_0 : i32, i32, i32, i32
  }
}

</mosaic_0001>

<llo_original>
// kernel: tpu_custom_call.1
$region0: #{tpu_custom_call.1}
  #allocation0 [shape = 'u32[]', space=smem, size = 0x4, offset = 0x4, fixed_abs, tag = 'smem constant byte address 0x4 - core index']
  #allocation1 [shape = 'u32[72,128]{1,0:T(1,128)}', space=vmem, size = 0x9000, scoped, tag = 'internal scratch']
  %s0 = inlined_call_operand.hbm [shape: f32[1,4], index: 0, kind: input, shape index: {}]
  %s1 = inlined_call_operand.hbm [shape: f32[2,4,2,128], index: 1, kind: input, shape index: {}]
  %s2 = inlined_call_operand.hbm [shape: f32[2,1,2,128], index: 2, kind: output, shape index: {}]
  %s3 = sld [smem:[#allocation0]]
  $region49: #{tpu_custom_call.1} parent=0
    _
  %s5 = ssub.s32 1, %s3
  %s6 = scalar_select 0, %s5, %s3
  $region1: #{tpu_custom_call.1} parent=0
    #allocation2 [shape = 'u8[512]{0}', space=smem, size = 0x200, scoped, tag = 'input window, operand 0, single buffered']
    #allocation3 [shape = 's32[2]{0}', space=sflag, size = 0x8, scoped, tag = 'scoped memory for tpu_custom_call.1']
    #allocation4 [shape = 's32[2]{0}', space=sflag, size = 0x8, scoped, tag = 'scoped memory for tpu_custom_call.1']
    #allocation5 [shape = 's32[2]{0}', space=sflag, size = 0x8, scoped, tag = 'scoped memory for tpu_custom_call.1']
    #allocation6 [shape = 'u8[8192]{0}', space=vmem, size = 0x2000, scoped, tag = 'input window, operand 1']
    #allocation7 [shape = 'u8[2048]{0}', space=vmem, size = 0x800, scoped, tag = 'output window, operand 0']
    %7 = vsyncpa [#allocation5], 0
    %8 = vsyncpa [#allocation3], 0
    %s9 = scalar_lea.sflag [#allocation3], 1
    %10 = vsyncpa %s9, 0
    %11 = vsyncpa [#allocation4], 0
    %s12 = scalar_lea.sflag [#allocation4], 1
    %13 = vsyncpa %s12, 0
    loop: start=0, step=1, limit=4
    $region2: #{tpu_custom_call.1} parent=1 // loop_pre_header
      _
    $region3: #{tpu_custom_call.1} parent=1 // loop_header
      %s15 = sphi 0, %s19
      %p16 = scmp.ge.s32.totalorder %s15, 4
      %s22 = sphi 0, %s34
      %s23 = sphi 0, %s30
      %s24 = sphi 0, %s22
      %s25 = sphi 0, %s23
      %s26 = sphi 0, %s24
      %s27 = sphi 0, %s25
      %s35 = sphi 0, %s35
      %s37 = sphi 0, %s35
      %s38 = sphi 0, %s37
      %s52 = sphi 0, %s38
      %s60 = sphi 0, %s62
      %s63 = sphi 0, %s60
      %s64 = sphi 0, %s63
      %s80 = sphi 0, %s64
      %s88 = sphi 0, %s90
      %s91 = sphi 0, %s88
      %s92 = sphi 0, %s91
      %s108 = sphi 0, %s92
    $region4: #{tpu_custom_call.1} parent=1 // loop_header_branch
      %18 = sbr.rel (%p16) target = $region8
    $region5: #{tpu_custom_call.1} parent=1 // loop_body
      %s20 = ssub.s32 %s15, 1
      %s21 = ssub.s32 %s15, 2
      %s28 = sadd.s32 1, %s23
      %p29 = scmp.ge.s32.totalorder %s28, 1
      %s30 = scalar_select %p29, 0, %s28
      %s31 = sadd.s32 1, %s22
      %s32 = scalar_select %p29, %s31, %s22
      %p33 = scmp.ge.s32.totalorder %s32, 2
      %s34 = scalar_select %p33, 0, %s32
      %s36 = sadd.s32 %s35, 1
      %p39 = scmp.eq.s32.totalorder %s15, 1
      %p40 = scmp.ne.s32.totalorder %s35, %s37
      %p41 = scmp.eq.s32.totalorder %s15, 0
      %p42 = por %p40, %p41
      %p43 = scmp.ne.s32.totalorder %s35, %s37
      %p44 = scmp.eq.s32.totalorder %s20, 1
      %p45 = por %p43, %p44
      %p46 = scmp.ne.s32.totalorder %s37, %s38
      %p47 = scmp.eq.s32.totalorder %s20, 0
      %p48 = por %p46, %p47
      %p49 = scmp.ne.s32.totalorder %s37, %s38
      %p50 = scmp.eq.s32.totalorder %s21, 1
      %p51 = por %p49, %p50
      %p53 = scmp.ne.s32.totalorder %s38, %s52
      %p54 = scmp.eq.s32.totalorder %s21, 0
      %p55 = por %p53, %p54
      %s56 = ssub.s32 %s22, %s34
      %s57 = ssub.s32 %s23, %s30
      %s58 = sor.u32 %s56, %s57
      %p59 = scmp.eq.s32.totalorder %s58, 0
      %s61 = sadd.s32 %s60, 1
      %s62 = scalar_select %p59, %s60, %s61
      %p65 = pneg %p59
      %p66 = scmp.eq.s32.totalorder %s15, 1
      %p67 = por %p65, %p66
      %p68 = scmp.ne.s32.totalorder %s60, %s63
      %p69 = scmp.eq.s32.totalorder %s15, 0
      %p70 = por %p68, %p69
      %p71 = scmp.ne.s32.totalorder %s60, %s63
      %p72 = scmp.eq.s32.totalorder %s20, 1
      %p73 = por %p71, %p72
      %p74 = scmp.ne.s32.totalorder %s63, %s64
      %p75 = scmp.eq.s32.totalorder %s20, 0
      %p76 = por %p74, %p75
      %p77 = scmp.ne.s32.totalorder %s63, %s64
      %p78 = scmp.eq.s32.totalorder %s21, 1
      %p79 = por %p77, %p78
      %p81 = scmp.ne.s32.totalorder %s64, %s80
      %p82 = scmp.eq.s32.totalorder %s21, 0
      %p83 = por %p81, %p82
      %s84 = ssub.s32 %s22, %s34
      %s85 = ssub.s32 %s23, %s30
      %s86 = sor.u32 %s84, %s85
      %p87 = scmp.eq.s32.totalorder %s86, 0
      %s89 = sadd.s32 %s88, 1
      %s90 = scalar_select %p87, %s88, %s89
      %p93 = pneg %p87
      %p94 = scmp.eq.s32.totalorder %s15, 1
      %p95 = por %p93, %p94
      %p96 = scmp.ne.s32.totalorder %s88, %s91
      %p97 = scmp.eq.s32.totalorder %s15, 0
      %p98 = por %p96, %p97
      %p99 = scmp.ne.s32.totalorder %s88, %s91
      %p100 = scmp.eq.s32.totalorder %s20, 1
      %p101 = por %p99, %p100
      %p102 = scmp.ne.s32.totalorder %s91, %s92
      %p103 = scmp.eq.s32.totalorder %s20, 0
      %p104 = por %p102, %p103
      %p105 = scmp.ne.s32.totalorder %s91, %s92
      %p106 = scmp.eq.s32.totalorder %s21, 1
      %p107 = por %p105, %p106
      %p109 = scmp.ne.s32.totalorder %s92, %s108
      %p110 = scmp.eq.s32.totalorder %s21, 0
      %p111 = por %p109, %p110
      %p112 = scmp.le.s32.totalorder 1, %s15
      %p113 = scmp.lt.s32.totalorder %s15, 3
      %p114 = pnand %p112, %p113
      %p115 = pneg %p114
      // Predicated region
      $region9: #{tpu_custom_call.1} parent=5 // pred_check
        _
      $region10: #{tpu_custom_call.1} parent=5 // pred_check_branch
        %117 = sbr.rel (%p114) target = $region12
      $region11: #{tpu_custom_call.1} parent=5 // pred_region
        %s118 = ssub.s32 %s15, 1
        // Predicated region
        $region13: #{tpu_custom_call.1} parent=11 // pred_check
          %p119 = pneg %p48
        $region14: #{tpu_custom_call.1} parent=11 // pred_check_branch
          %121 = sbr.rel (%p119) target = $region16
        $region15: #{tpu_custom_call.1} parent=11 // pred_region
          %123 = vsyncadd [#allocation5], 0
          %s125 = sshll.u32 %s0, 4
          %s126 = int_to_ptr.hbm [resolvable:$true] %s125
          %128 = dma.hbm_to_smem %s126, 16, [#allocation2], [#allocation5]
        $region16: #{tpu_custom_call.1} parent=11 // pred_fallthru
          _
      $region12: #{tpu_custom_call.1} parent=5 // pred_fallthru
        _
      %p129 = scmp.lt.s32.totalorder %s15, 2
      // Predicated region
      $region17: #{tpu_custom_call.1} parent=5 // pred_check
        %p130 = pneg %p129
      $region18: #{tpu_custom_call.1} parent=5 // pred_check_branch
        %132 = sbr.rel (%p130) target = $region20
      $region19: #{tpu_custom_call.1} parent=5 // pred_region
        // Predicated region
        $region21: #{tpu_custom_call.1} parent=19 // pred_check
          %p133 = pneg %p70
        $region22: #{tpu_custom_call.1} parent=19 // pred_check_branch
          %135 = sbr.rel (%p133) target = $region24
        $region23: #{tpu_custom_call.1} parent=19 // pred_region
          %s136 = sand.u32 %s60, 1
          %s137 = scalar_lea.sflag [#allocation3], %s136
          %s138 = sand.u32 %s60, 1
          %s139 = smul.addr %s138, 8
          %s140 = scalar_lea.vmem [#allocation6], %s139
          %142 = vsyncadd %s137, 0
          %s143 = smul.addr %s22, 4
          %s144 = sadd.s32 %s23, %s143
          %s145 = smul.addr %s144, 2
          %s146 = scalar_lea.hbm %s1, %s145
          %s147 = sshll.u32 %s146, 4
          %s148 = int_to_ptr.hbm [resolvable:$true] %s147
          %s149 = sshll.u32 %s140, 4
          %s150 = int_to_ptr.vmem [resolvable:$true] %s149
          %155 = dma.hbm_to_vmem [thread:$0]  %s148, 128, %s150, %s137, 32, 32, 2
        $region24: #{tpu_custom_call.1} parent=19 // pred_fallthru
          _
      $region20: #{tpu_custom_call.1} parent=5 // pred_fallthru
        _
      %p156 = scmp.le.s32.totalorder 1, %s15
      %p157 = scmp.lt.s32.totalorder %s15, 3
      %p158 = pnand %p156, %p157
      %p159 = pneg %p158
      // Predicated region
      $region25: #{tpu_custom_call.1} parent=5 // pred_check
        _
      $region26: #{tpu_custom_call.1} parent=5 // pred_check_branch
        %161 = sbr.rel (%p158) target = $region28
      $region27: #{tpu_custom_call.1} parent=5 // pred_region
        %s162 = ssub.s32 %s15, 1
        // Predicated region
        $region29: #{tpu_custom_call.1} parent=27 // pred_check
          %p163 = pneg %p48
        $region30: #{tpu_custom_call.1} parent=27 // pred_check_branch
          %165 = sbr.rel (%p163) target = $region32
        $region31: #{tpu_custom_call.1} parent=27 // pred_region
          %167 = dma.done [#allocation5], 16
        $region32: #{tpu_custom_call.1} parent=27 // pred_fallthru
          _
        %s168 = sand.u32 %s63, 1
        %s169 = scalar_lea.sflag [#allocation3], %s168
        %s170 = sand.u32 %s63, 1
        %s171 = smul.addr %s170, 8
        %s172 = scalar_lea.vmem [#allocation6], %s171
        // Predicated region
        $region33: #{tpu_custom_call.1} parent=27 // pred_check
          %p173 = pneg %p76
        $region34: #{tpu_custom_call.1} parent=27 // pred_check_branch
          %175 = sbr.rel (%p173) target = $region36
        $region35: #{tpu_custom_call.1} parent=27 // pred_region
          %177 = dma.done %s169, 128
        $region36: #{tpu_custom_call.1} parent=27 // pred_fallthru
          _
        %178 = sfence
        %p179 = pneg %p48
        %p180 = pneg %p45
        %s181 = sand.u32 %s63, 1
        %s182 = scalar_lea.sflag [#allocation3], %s181
        %s183 = sand.u32 %s63, 1
        %s184 = smul.addr %s183, 8
        %s185 = scalar_lea.vmem [#allocation6], %s184
        %p186 = pneg %p76
        %p187 = pneg %p73
        %p188 = pneg %p104
        %p189 = pneg %p101
        %s190 = sand.u32 %s91, 1
        %s191 = scalar_lea.sflag [#allocation4], %s190
        %s192 = sand.u32 %s91, 1
        %s193 = smul.addr %s192, 2
        %s194 = scalar_lea.vmem [#allocation7], %s193
        %v195 = vld [vmem:[%s172] sm:$0x3]
        %v196 = vld [vmem:[%s172 + $0x2] sm:$0x3]
        %v197 = vld [vmem:[%s172 + $0x4] sm:$0x3]
        %v198 = vld [vmem:[%s172 + $0x6] sm:$0x3]
        %s199 = sld [smem:[#allocation2]]
        %v200 = vstv %s199
        %v201 = vmul.f32 %v200, %v195
        %s202 = sld [smem:[#allocation2 + $0x1]]
        %v203 = vstv %s202
        %v204 = vmul.f32 %v203, %v196
        %v205 = vadd.f32 %v201, %v204
        %s206 = sld [smem:[#allocation2 + $0x2]]
        %v207 = vstv %s206
        %v208 = vmul.f32 %v207, %v197
        %v209 = vadd.f32 %v205, %v208
        %s210 = sld [smem:[#allocation2 + $0x3]]
        %v211 = vstv %s210
        %v212 = vmul.f32 %v211, %v198
        %v213 = vadd.f32 %v209, %v212
        %214 = vst [vmem:[%s194] sm:$0x3] %v213
        %s215 = sand.u32 %s91, 1
        %s216 = scalar_lea.sflag [#allocation4], %s215
        %s217 = sand.u32 %s91, 1
        %s218 = smul.addr %s217, 2
        %s219 = scalar_lea.vmem [#allocation7], %s218
        // Predicated region
        $region37: #{tpu_custom_call.1} parent=27 // pred_check
          %p220 = pneg %p101
        $region38: #{tpu_custom_call.1} parent=27 // pred_check_branch
          %222 = sbr.rel (%p220) target = $region40
        $region39: #{tpu_custom_call.1} parent=27 // pred_region
          %224 = vsyncadd %s216, 0
          %s225 = sadd.s32 %s25, %s24
          %s226 = smul.addr %s225, 2
          %s227 = scalar_lea.hbm %s2, %s226
          %s229 = sshll.u32 %s219, 4
          %s230 = int_to_ptr.vmem [resolvable:$true] %s229
          %s231 = sshll.u32 %s227, 4
          %s232 = int_to_ptr.hbm [resolvable:$true] %s231
          %234 = dma.vmem_to_hbm [thread:$0]  %s230, 32, %s232, %s216
        $region40: #{tpu_custom_call.1} parent=27 // pred_fallthru
          _
      $region28: #{tpu_custom_call.1} parent=5 // pred_fallthru
        _
      %p235 = scmp.le.s32.totalorder 2, %s15
      // Predicated region
      $region41: #{tpu_custom_call.1} parent=5 // pred_check
        %p236 = pneg %p235
      $region42: #{tpu_custom_call.1} parent=5 // pred_check_branch
        %238 = sbr.rel (%p236) target = $region44
      $region43: #{tpu_custom_call.1} parent=5 // pred_region
        %s239 = ssub.s32 %s15, 2
        // Predicated region
        $region45: #{tpu_custom_call.1} parent=43 // pred_check
          %p240 = pneg %p107
        $region46: #{tpu_custom_call.1} parent=43 // pred_check_branch
          %242 = sbr.rel (%p240) target = $region48
        $region47: #{tpu_custom_call.1} parent=43 // pred_region
          %s243 = sand.u32 %s92, 1
          %s244 = scalar_lea.sflag [#allocation4], %s243
          %s245 = sand.u32 %s92, 1
          %s246 = smul.addr %s245, 2
          %s247 = scalar_lea.vmem [#allocation7], %s246
          %249 = dma.done %s244, 32
        $region48: #{tpu_custom_call.1} parent=43 // pred_fallthru
          _
      $region44: #{tpu_custom_call.1} parent=5 // pred_fallthru
        _
    $region6: #{tpu_custom_call.1} parent=1 // loop_footer
      %s19 = sadd.s32 1, %s15
    $region7: #{tpu_custom_call.1} parent=1 // loop_footer_branch
      %14 = sbr.rel target = $region3
    $region8: #{tpu_custom_call.1} parent=1 // loop_exit
      _
    %250 = vsyncpa [#allocation3], 1
    %s251 = scalar_lea.sflag [#allocation3], 1
    %252 = vsyncpa %s251, 1
    %253 = vsyncpa [#allocation4], 1
    %s254 = scalar_lea.sflag [#allocation4], 1
    %255 = vsyncpa %s254, 1
    %256 = vsyncpa [#allocation5], 1
    %s257 = scalar_lea.sflag [#allocation5], 1
    %258 = vsyncpa %s257, 1

</llo_original>
